<compile_context>
chip_gen: v6e
topology: v6e:2x2x1
jax: 0.10.0
libtpu: 0.0.40
codegen_flags: <defaults>
</compile_context>

<pallas_src>
import numpy as np
import jax
import jax.numpy as jnp
from jax.experimental import pallas as pl
from jax.experimental.pallas import tpu as pltpu

_LANES = 128
_DEFAULT_BLOCK_ROWS = 512       # 512x128 f32 = 256 KiB/stream block: ~85%+ of HBM roofline
_MAX_BLOCK_BYTES = 1 << 20      # per-stream block cap (f32) -> far below v7x scoped-VMEM limit


# ----------------------------------------------------------------------------
# Packing / tiling plan (no HBM copies)
# ----------------------------------------------------------------------------
def _pack_spatial(x):
    """Lane-dense view without padded HBM copies.

    * W % 128 == 0      -> native (N, C, H, W)          (already lane-dense)
    * (H*W) % 128 == 0  -> reshape to (N, C, H*W/128, 128)
    * otherwise         -> native (N, C, H, W), lanes = W; ragged grid tail is
                           masked inside the kernel instead of jnp.pad-ing.
    """
    n, c, h, w = x.shape
    if w % _LANES == 0:
        return x
    hw = h * w
    if hw % _LANES == 0:
        return x.reshape(n, c, hw // _LANES, _LANES)
    return x


def _min_sublane(dtype):
    bits = np.dtype(dtype).itemsize * 8
    if bits >= 32:
        return 8
    if bits == 16:
        return 16
    return 32


def _grid_plan(n_batch, rows, lanes, dtypes, block_rows):
    """Shared tiling plan: row-block size, batch-1 split, masking / fold flags."""
    sub = max(_min_sublane(dt) for dt in dtypes)
    cap = max(sub, (_MAX_BLOCK_BYTES // (lanes * 4)) // sub * sub)
    target = min(int(block_rows), cap)
    br = rows if target >= rows else max(sub, (target // sub) * sub)
    rt = -(-rows // br)                       # number of row blocks (ceil-div)
    # Batch 1 with a single row block: shrink the block so the row axis can be
    # split into two parallel halves (keeps both v7x TensorCores busy).
    if n_batch == 1 and rt == 1:
        half = -(-rows // 2)
        br2 = -(-half // sub) * sub
        if br2 < rows:
            br, rt = br2, -(-rows // br2)     # rt == 2 by construction
    # TODO(synk): odd rt at batch 1 stays on one TensorCore; an uneven split
    # would need a clamped index_map.
    n_splits = 2 if (n_batch == 1 and rt >= 2 and rt % 2 == 0) else 1
    rt_split = rt // n_splits
    needs_mask = rt * br > rows               # ragged last row block
    fold = (br % 8 == 0) and (br > 8)         # fold (br,L)->(8,L) pre-accumulate
    acc_rows = 8 if br % 8 == 0 else br
    return br, rt_split, n_splits, needs_mask, fold, acc_rows


# ----------------------------------------------------------------------------
# Kernels (built per tiling plan)
# ----------------------------------------------------------------------------
def _build_l1_kernel(br, lanes, rows_total, rt_split, needs_mask, fold):
    def kernel(p_ref, t_ref, o_ref, acc_ref):
        p_idx = pl.program_id(1)
        r_idx = pl.program_id(2)
        c_idx = pl.program_id(3)

        @pl.when((r_idx == 0) & (c_idx == 0))
        def _():
            acc_ref[...] = jnp.zeros_like(acc_ref)

        diff = jnp.abs(p_ref[0, 0].astype(jnp.float32)
                       - t_ref[0, 0].astype(jnp.float32))
        if needs_mask:
            row0 = (p_idx * rt_split + r_idx) * br
            rows = jax.lax.broadcasted_iota(jnp.int32, (br, lanes), 0) + row0
            diff = jnp.where(rows < rows_total, diff, 0.0)
        if fold:
            diff = jnp.sum(diff.reshape(br // 8, 8, lanes), axis=0)
        acc_ref[...] += diff

        @pl.when((r_idx == pl.num_programs(2) - 1)
                 & (c_idx == pl.num_programs(3) - 1))
        def _():
            o_ref[0, 0] = jnp.broadcast_to(jnp.sum(acc_ref[...]), (8, _LANES))
    return kernel


def _build_fused_kernel(br, lanes, rows_total, rt_split, needs_mask, fold):
    def kernel(thr_ref, p_ref, t_ref, d_ref, base_ref, msum_ref, acc_b, acc_m):
        p_idx = pl.program_id(1)
        r_idx = pl.program_id(2)
        c_idx = pl.program_id(3)

        @pl.when((r_idx == 0) & (c_idx == 0))
        def _():
            acc_b[...] = jnp.zeros_like(acc_b)
            acc_m[...] = jnp.zeros_like(acc_m)

        diff = jnp.abs(p_ref[0, 0].astype(jnp.float32)
                       - t_ref[0, 0].astype(jnp.float32))
        if needs_mask:
            row0 = (p_idx * rt_split + r_idx) * br
            rows = jax.lax.broadcasted_iota(jnp.int32, (br, lanes), 0) + row0
            # where (not multiply) so garbage/NaN in the ragged tail is killed
            diff = jnp.where(rows < rows_total, diff, 0.0)
        # |p*m - t*m| == |p - t| * m for a {0,1} mask
        mask = (d_ref[0, 0].astype(jnp.float32) > thr_ref[0, 0]).astype(jnp.float32)
        masked = diff * mask
        if fold:
            diff = jnp.sum(diff.reshape(br // 8, 8, lanes), axis=0)
            masked = jnp.sum(masked.reshape(br // 8, 8, lanes), axis=0)
        acc_b[...] += diff
        acc_m[...] += masked

        @pl.when((r_idx == pl.num_programs(2) - 1)
                 & (c_idx == pl.num_programs(3) - 1))
        def _():
            base_ref[0, 0] = jnp.broadcast_to(jnp.sum(acc_b[...]), (8, _LANES))
            msum_ref[0, 0] = jnp.broadcast_to(jnp.sum(acc_m[...]), (8, _LANES))
    return kernel


# ----------------------------------------------------------------------------
# pallas_call wrappers
# ----------------------------------------------------------------------------
def _l1_sum(pred_p, target_p, block_rows):
    N, C, R, L = pred_p.shape
    br, rt_split, n_splits, needs_mask, fold, acc_rows = _grid_plan(
        N, R, L, (pred_p.dtype, target_p.dtype), block_rows)

    pt_spec = pl.BlockSpec((1, 1, br, L),
                           lambda n, p, r, c: (n, c, p * rt_split + r, 0))
    # TODO(synk): sweep pipeline_mode=pl.Buffered(3) on pt_spec if DMA gaps show up.
    out_spec = pl.BlockSpec((1, 1, 8, _LANES), lambda n, p, r, c: (n, p, 0, 0))

    elems = N * C * R * L
    bytes_in = (pred_p.size * pred_p.dtype.itemsize
                + target_p.size * target_p.dtype.itemsize)
    out = pl.pallas_call(
        _build_l1_kernel(br, L, R, rt_split, needs_mask, fold),
        out_shape=jax.ShapeDtypeStruct((N, n_splits, 8, _LANES), jnp.float32),
        grid_spec=pltpu.PrefetchScalarGridSpec(
            num_scalar_prefetch=0,
            grid=(N, n_splits, rt_split, C),
            in_specs=[pt_spec, pt_spec],
            out_specs=out_spec,
            scratch_shapes=[pltpu.VMEM((acc_rows, L), jnp.float32)]),
        compiler_params=pltpu.CompilerParams(
            dimension_semantics=("parallel", "parallel", "arbitrary", "arbitrary")),
        cost_estimate=pl.CostEstimate(flops=3 * elems, transcendentals=0,
                                      bytes_accessed=int(bytes_in)),
    )(pred_p, target_p)
    return jnp.sum(out[:, :, 0, 0])


def _fused_sums(threshold, pred_p, target_p, depth_p, block_rows):
    """One pass over pred/target/depth: per-slab partials of sum(|p-t|) and sum(|p-t|*mask)."""
    N, C, R, L = pred_p.shape
    dC = depth_p.shape[1]
    br, rt_split, n_splits, needs_mask, fold, acc_rows = _grid_plan(
        N, R, L, (pred_p.dtype, target_p.dtype, depth_p.dtype), block_rows)

    pt_spec = pl.BlockSpec((1, 1, br, L),
                           lambda n, p, r, c: (n, c, p * rt_split + r, 0))
    if dC == 1:
        # depth block index is independent of the innermost channel axis ->
        # Pallas skips the re-DMA, so depth is streamed from HBM exactly once.
        d_spec = pl.BlockSpec((1, 1, br, L),
                              lambda n, p, r, c: (n, 0, p * rt_split + r, 0))
    else:
        d_spec = pt_spec
    out_spec = pl.BlockSpec((1, 1, 8, _LANES), lambda n, p, r, c: (n, p, 0, 0))
    out_sds = jax.ShapeDtypeStruct((N, n_splits, 8, _LANES), jnp.float32)

    elems = N * C * R * L
    bytes_in = (pred_p.size * pred_p.dtype.itemsize
                + target_p.size * target_p.dtype.itemsize
                + depth_p.size * depth_p.dtype.itemsize)
    base, msum = pl.pallas_call(
        _build_fused_kernel(br, L, R, rt_split, needs_mask, fold),
        out_shape=(out_sds, out_sds),
        grid_spec=pltpu.PrefetchScalarGridSpec(
            num_scalar_prefetch=0,
            grid=(N, n_splits, rt_split, C),
            in_specs=[pl.BlockSpec(memory_space=pltpu.SMEM),   # threshold scalar
                      pt_spec, pt_spec, d_spec],
            out_specs=[out_spec, out_spec],
            scratch_shapes=[pltpu.VMEM((acc_rows, L), jnp.float32),
                            pltpu.VMEM((acc_rows, L), jnp.float32)]),
        compiler_params=pltpu.CompilerParams(
            dimension_semantics=("parallel", "parallel", "arbitrary", "arbitrary")),
        cost_estimate=pl.CostEstimate(flops=6 * elems, transcendentals=0,
                                      bytes_accessed=int(bytes_in)),
    )(jnp.reshape(threshold.astype(jnp.float32), (1, 1)), pred_p, target_p, depth_p)
    return jnp.sum(base[:, :, 0, 0]), jnp.sum(msum[:, :, 0, 0])


# ----------------------------------------------------------------------------
# Module-equivalent wrapper
# ----------------------------------------------------------------------------
class DepthAwareLoss:
    def __init__(self, loss_weight=1.0, depth_weight=0.5, gradient_weight=0.3,
                 edge_weight=0.2, use_depth_gradient=True,
                 block_rows=_DEFAULT_BLOCK_ROWS, **kwargs):
        self.loss_weight = float(loss_weight)
        self.depth_weight = float(depth_weight)
        self.gradient_weight = float(gradient_weight)
        self.edge_weight = float(edge_weight)
        self.use_depth_gradient = use_depth_gradient
        self.block_rows = int(block_rows)
        # Registered buffers (deterministic, shapes (1,1,3,3)); NOT used in forward().
        self.sobel_x = jnp.array([[-1, 0, 1], [-2, 0, 2], [-1, 0, 1]],
                                 dtype=jnp.float32).reshape(1, 1, 3, 3)
        self.sobel_y = jnp.array([[-1, -2, -1], [0, 0, 0], [1, 2, 1]],
                                 dtype=jnp.float32).reshape(1, 1, 3, 3)
        self._fwd_base = jax.jit(self._forward_base)
        self._fwd_depth = jax.jit(self._forward_depth)

    def _forward_base(self, pred, target):
        n, c, h, w = pred.shape
        pred_p = _pack_spatial(pred)
        target_p = _pack_spatial(target)
        base = _l1_sum(pred_p, target_p, self.block_rows) / float(n * c * h * w)
        return (base * self.loss_weight).astype(pred.dtype)

    def _forward_depth(self, pred, target, depth):
        n, c, h, w = pred.shape
        n_pred = float(n * c * h * w)
        if depth.shape[-2:] != (h, w):
            # glue: bilinear resize, half-pixel centers (align_corners=False)
            depth = jax.image.resize(depth, depth.shape[:-2] + (h, w),
                                     method="bilinear")
        # Threshold + "mask non-empty" gate, fused by XLA with the resize producer.
        # mask.sum() > 0  <=>  max(depth) > mean(depth)
        depth_mean = jnp.mean(depth, dtype=jnp.float32)
        has_mask = jnp.max(depth).astype(jnp.float32) > depth_mean

        pred_p = _pack_spatial(pred)
        target_p = _pack_spatial(target)
        depth_p = _pack_spatial(depth)
        base_sum, masked_sum = _fused_sums(depth_mean, pred_p, target_p,
                                           depth_p, self.block_rows)
        base_loss = base_sum / n_pred
        depth_loss = masked_sum / n_pred
        total = base_loss + jnp.where(has_mask,
                                      self.depth_weight * depth_loss,
                                      jnp.float32(0.0))
        return (total * self.loss_weight).astype(pred.dtype)

    def __call__(self, pred, target, depth=None, **kwargs):
        if depth is None:
            return self._fwd_base(pred, target)
        return self._fwd_depth(pred, target, depth)


# ----------------------------------------------------------------------------
if __name__ == "__main__":
    key = jax.random.PRNGKey(0)
    k1, k2, k3, k4, k5, k6, k7, k8, k9 = jax.random.split(key, 9)

    loss_fn = DepthAwareLoss(loss_weight=1.0, depth_weight=0.5)

    # --- Test 1: aligned spatial size (H*W % 128 == 0), batch 2, f32 ---------
    pred = jax.random.normal(k1, (2, 4, 16, 16), dtype=jnp.float32)
    target = jax.random.normal(k2, (2, 4, 16, 16), dtype=jnp.float32)
    depth = jax.random.uniform(k3, (2, 1, 16, 16), dtype=jnp.float32)
    out = jax.block_until_ready(loss_fn(pred, target, depth))

    base_ref = jnp.mean(jnp.abs(pred - target))
    mask_ref = (depth > jnp.mean(depth)).astype(jnp.float32)
    depth_ref = jnp.mean(jnp.abs(pred * mask_ref - target * mask_ref))
    ref = base_ref + 0.5 * depth_ref
    assert np.allclose(np.array(out), np.array(ref), rtol=1e-5, atol=1e-6), (out, ref)

    # depth=None path
    out2 = jax.block_until_ready(loss_fn(pred, target))
    assert np.allclose(np.array(out2), np.array(base_ref), rtol=1e-5, atol=1e-6), (out2, base_ref)

    # --- Test 2: ragged spatial size (H*W % 128 != 0), batch 1 ---------------
    # exercises: native layout (lanes=W), batch-1 two-way row split, in-kernel
    # tail masking, and the (br,L)->(8,L) vreg fold.
    pred_b = jax.random.normal(k4, (1, 3, 28, 24), dtype=jnp.float32)
    target_b = jax.random.normal(k5, (1, 3, 28, 24), dtype=jnp.float32)
    depth_b = jax.random.uniform(k6, (1, 1, 28, 24), dtype=jnp.float32)
    out_b = jax.block_until_ready(loss_fn(pred_b, target_b, depth_b))
    mask_b = (depth_b > jnp.mean(depth_b)).astype(jnp.float32)
    ref_b = (jnp.mean(jnp.abs(pred_b - target_b))
             + 0.5 * jnp.mean(jnp.abs(pred_b * mask_b - target_b * mask_b)))
    assert np.allclose(np.array(out_b), np.array(ref_b), rtol=1e-5, atol=1e-6), (out_b, ref_b)

    # --- Test 3: bf16 pred/target streamed in native dtype + depth resize ----
    pred_c = jax.random.normal(k7, (2, 2, 16, 16), dtype=jnp.bfloat16)
    target_c = jax.random.normal(k8, (2, 2, 16, 16), dtype=jnp.bfloat16)
    depth_c = jax.random.uniform(k9, (2, 1, 8, 8), dtype=jnp.float32)
    out_c = jax.block_until_ready(loss_fn(pred_c, target_c, depth_c))
    pc, tc = pred_c.astype(jnp.float32), target_c.astype(jnp.float32)
    depth_rc = jax.image.resize(depth_c, (2, 1, 16, 16), method="bilinear")
    mask_c = (depth_rc > jnp.mean(depth_rc)).astype(jnp.float32)
    ref_c = (jnp.mean(jnp.abs(pc - tc))
             + 0.5 * jnp.mean(jnp.abs(pc * mask_c - tc * mask_c)))
    assert np.allclose(float(out_c), float(ref_c), rtol=2e-2, atol=2e-2), (out_c, ref_c)

    print("KERNEL_OK")
</pallas_src>

<mosaic_0001>
module attributes {stable_mosaic.version = 11 : i64} {
  func.func @kernel(%arg0: i32, %arg1: i32, %arg2: i32, %arg3: i32, %arg4: memref<1x1xf32, #tpu.memory_space<smem>>, %arg5: memref<1x1x2x128xf32, #tpu.memory_space<vmem>>, %arg6: memref<1x1x2x128xf32, #tpu.memory_space<vmem>>, %arg7: memref<1x1x2x128xf32, #tpu.memory_space<vmem>>, %arg8: memref<1x1x8x128xf32, #tpu.memory_space<vmem>>, %arg9: memref<1x1x8x128xf32, #tpu.memory_space<vmem>>, %arg10: memref<2x128xf32, #tpu.memory_space<vmem>>, %arg11: memref<2x128xf32, #tpu.memory_space<vmem>>) attributes {dimension_semantics = [#tpu.dimension_semantics<parallel>, #tpu.dimension_semantics<parallel>, #tpu.dimension_semantics<arbitrary>, #tpu.dimension_semantics<arbitrary>], iteration_bounds = array<i64: 2, 1, 1, 4>, scalar_prefetch = 0 : i64, scratch_operands = 2 : i64, tpu.core_type = #tpu.core_type<tc>, window_params = [{transform_indices = @transform_0, window_bounds = array<i64: 1, 1>}, {transform_indices = @transform_1, window_bounds = array<i64: 1, 1, 2, 128>}, {transform_indices = @transform_2, window_bounds = array<i64: 1, 1, 2, 128>}, {transform_indices = @transform_3, window_bounds = array<i64: 1, 1, 2, 128>}, {transform_indices = @transform_4, window_bounds = array<i64: 1, 1, 8, 128>}, {transform_indices = @transform_5, window_bounds = array<i64: 1, 1, 8, 128>}]} {
    %c0_i32 = arith.constant 0 : i32
    %0 = arith.cmpi eq, %arg2, %c0_i32 : i32
    %c0_i32_0 = arith.constant 0 : i32
    %1 = arith.cmpi eq, %arg3, %c0_i32_0 : i32
    %2 = arith.andi %0, %1 : i1
    %3 = arith.extui %2 : i1 to i32
    %c0_i32_1 = arith.constant 0 : i32
    %4 = arith.cmpi ne, %3, %c0_i32_1 : i32
    scf.if %4 {
      %cst = arith.constant 0.000000e+00 : f32
      %30 = vector.broadcast %cst : f32 to vector<2x128xf32>
      %c0_25 = arith.constant 0 : index
      %c0_26 = arith.constant 0 : index
      %31 = vector.load %arg10[%c0_25, %c0_26] : memref<2x128xf32, #tpu.memory_space<vmem>>, vector<2x128xf32>
      tpu.vector_store %arg10[%c0_25, %c0_26], %30 {strides = array<i32>} : memref<2x128xf32, #tpu.memory_space<vmem>>, vector<2x128xf32>,
      %cst_27 = arith.constant 0.000000e+00 : f32
      %32 = vector.broadcast %cst_27 : f32 to vector<2x128xf32>
      %c0_28 = arith.constant 0 : index
      %c0_29 = arith.constant 0 : index
      %33 = vector.load %arg11[%c0_28, %c0_29] : memref<2x128xf32, #tpu.memory_space<vmem>>, vector<2x128xf32>
      tpu.vector_store %arg11[%c0_28, %c0_29], %32 {strides = array<i32>} : memref<2x128xf32, #tpu.memory_space<vmem>>, vector<2x128xf32>,
    } else {
    }
    %c0 = arith.constant 0 : index
    %c0_2 = arith.constant 0 : index
    %c0_3 = arith.constant 0 : index
    %c0_4 = arith.constant 0 : index
    %5 = vector.load %arg5[%c0, %c0_2, %c0_3, %c0_4] : memref<1x1x2x128xf32, #tpu.memory_space<vmem>>, vector<1x1x2x128xf32>
    %6 = vector.shape_cast %5 : vector<1x1x2x128xf32> to vector<2x128xf32>
    %c0_5 = arith.constant 0 : index
    %c0_6 = arith.constant 0 : index
    %c0_7 = arith.constant 0 : index
    %c0_8 = arith.constant 0 : index
    %7 = vector.load %arg6[%c0_5, %c0_6, %c0_7, %c0_8] : memref<1x1x2x128xf32, #tpu.memory_space<vmem>>, vector<1x1x2x128xf32>
    %8 = vector.shape_cast %7 : vector<1x1x2x128xf32> to vector<2x128xf32>
    %9 = arith.subf %6, %8 : vector<2x128xf32>
    %10 = math.absf %9 : vector<2x128xf32>
    %c0_9 = arith.constant 0 : index
    %c0_10 = arith.constant 0 : index
    %c0_11 = arith.constant 0 : index
    %c0_12 = arith.constant 0 : index
    %11 = vector.load %arg7[%c0_9, %c0_10, %c0_11, %c0_12] : memref<1x1x2x128xf32, #tpu.memory_space<vmem>>, vector<1x1x2x128xf32>
    %12 = vector.shape_cast %11 : vector<1x1x2x128xf32> to vector<2x128xf32>
    %c0_13 = arith.constant 0 : index
    %c0_14 = arith.constant 0 : index
    %13 = memref.load %arg4[%c0_13, %c0_14] : memref<1x1xf32, #tpu.memory_space<smem>>
    %14 = vector.broadcast %13 : f32 to vector<2x128xf32>
    %15 = arith.cmpf ogt, %12, %14 : vector<2x128xf32>
    %16 = arith.extui %15 : vector<2x128xi1> to vector<2x128xi32>
    %17 = arith.sitofp %16 : vector<2x128xi32> to vector<2x128xf32>
    %18 = arith.mulf %10, %17 : vector<2x128xf32>
    %c0_15 = arith.constant 0 : index
    %c0_16 = arith.constant 0 : index
    %19 = vector.load %arg10[%c0_15, %c0_16] : memref<2x128xf32, #tpu.memory_space<vmem>>, vector<2x128xf32>
    %20 = arith.addf %19, %10 : vector<2x128xf32>
    %c0_17 = arith.constant 0 : index
    %c0_18 = arith.constant 0 : index
    %21 = vector.load %arg10[%c0_17, %c0_18] : memref<2x128xf32, #tpu.memory_space<vmem>>, vector<2x128xf32>
    tpu.vector_store %arg10[%c0_17, %c0_18], %20 {strides = array<i32>} : memref<2x128xf32, #tpu.memory_space<vmem>>, vector<2x128xf32>,
    %c0_19 = arith.constant 0 : index
    %c0_20 = arith.constant 0 : index
    %22 = vector.load %arg11[%c0_19, %c0_20] : memref<2x128xf32, #tpu.memory_space<vmem>>, vector<2x128xf32>
    %23 = arith.addf %22, %18 : vector<2x128xf32>
    %c0_21 = arith.constant 0 : index
    %c0_22 = arith.constant 0 : index
    %24 = vector.load %arg11[%c0_21, %c0_22] : memref<2x128xf32, #tpu.memory_space<vmem>>, vector<2x128xf32>
    tpu.vector_store %arg11[%c0_21, %c0_22], %23 {strides = array<i32>} : memref<2x128xf32, #tpu.memory_space<vmem>>, vector<2x128xf32>,
    %c0_i32_23 = arith.constant 0 : i32
    %25 = arith.cmpi eq, %arg2, %c0_i32_23 : i32
    %c3_i32 = arith.constant 3 : i32
    %26 = arith.cmpi eq, %arg3, %c3_i32 : i32
    %27 = arith.andi %25, %26 : i1
    %28 = arith.extui %27 : i1 to i32
    %c0_i32_24 = arith.constant 0 : i32
    %29 = arith.cmpi ne, %28, %c0_i32_24 : i32
    scf.if %29 {
      %c0_25 = arith.constant 0 : index
      %c0_26 = arith.constant 0 : index
      %30 = vector.load %arg10[%c0_25, %c0_26] : memref<2x128xf32, #tpu.memory_space<vmem>>, vector<2x128xf32>
      %31 = vector.shape_cast %30 : vector<2x128xf32> to vector<1x2x128xf32>
      %cst = arith.constant dense<0.000000e+00> : vector<1xf32>
      %32 = vector.multi_reduction <add>, %31, %cst [1, 2] : vector<1x2x128xf32> to vector<1xf32>
      %33 = vector.shape_cast %32 : vector<1xf32> to vector<1x1x1xf32>
      %34 = vector.extract %33[0, 0, 0] : f32 from vector<1x1x1xf32>
      %35 = vector.broadcast %34 : f32 to vector<8x128xf32>
      %c0_27 = arith.constant 0 : index
      %c0_28 = arith.constant 0 : index
      %c0_29 = arith.constant 0 : index
      %c0_30 = arith.constant 0 : index
      %36 = vector.load %arg8[%c0_27, %c0_28, %c0_29, %c0_30] : memref<1x1x8x128xf32, #tpu.memory_space<vmem>>, vector<1x1x8x128xf32>
      %37 = vector.shape_cast %36 : vector<1x1x8x128xf32> to vector<8x128xf32>
      %38 = vector.shape_cast %35 : vector<8x128xf32> to vector<1x1x8x128xf32>
      tpu.vector_store %arg8[%c0_27, %c0_28, %c0_29, %c0_30], %38 {strides = array<i32>} : memref<1x1x8x128xf32, #tpu.memory_space<vmem>>, vector<1x1x8x128xf32>,
      %c0_31 = arith.constant 0 : index
      %c0_32 = arith.constant 0 : index
      %39 = vector.load %arg11[%c0_31, %c0_32] : memref<2x128xf32, #tpu.memory_space<vmem>>, vector<2x128xf32>
      %40 = vector.shape_cast %39 : vector<2x128xf32> to vector<1x2x128xf32>
      %cst_33 = arith.constant dense<0.000000e+00> : vector<1xf32>
      %41 = vector.multi_reduction <add>, %40, %cst_33 [1, 2] : vector<1x2x128xf32> to vector<1xf32>
      %42 = vector.shape_cast %41 : vector<1xf32> to vector<1x1x1xf32>
      %43 = vector.extract %42[0, 0, 0] : f32 from vector<1x1x1xf32>
      %44 = vector.broadcast %43 : f32 to vector<8x128xf32>
      %c0_34 = arith.constant 0 : index
      %c0_35 = arith.constant 0 : index
      %c0_36 = arith.constant 0 : index
      %c0_37 = arith.constant 0 : index
      %45 = vector.load %arg9[%c0_34, %c0_35, %c0_36, %c0_37] : memref<1x1x8x128xf32, #tpu.memory_space<vmem>>, vector<1x1x8x128xf32>
      %46 = vector.shape_cast %45 : vector<1x1x8x128xf32> to vector<8x128xf32>
      %47 = vector.shape_cast %44 : vector<8x128xf32> to vector<1x1x8x128xf32>
      tpu.vector_store %arg9[%c0_34, %c0_35, %c0_36, %c0_37], %47 {strides = array<i32>} : memref<1x1x8x128xf32, #tpu.memory_space<vmem>>, vector<1x1x8x128xf32>,
    } else {
    }
    return
  }
  func.func @transform_0(%arg0: i32, %arg1: i32, %arg2: i32, %arg3: i32) -> (i32, i32) {
    %c0_i32 = arith.constant 0 : i32
    %c0_i32_0 = arith.constant 0 : i32
    %c0_i32_1 = arith.constant 0 : i32
    return %c0_i32, %c0_i32_0 : i32, i32
  }
  func.func @transform_1(%arg0: i32, %arg1: i32, %arg2: i32, %arg3: i32) -> (i32, i32, i32, i32) {
    %c1_i32 = arith.constant 1 : i32
    %0 = arith.muli %arg1, %c1_i32 : i32
    %1 = arith.addi %0, %arg2 : i32
    %c0_i32 = arith.constant 0 : i32
    %c0_i32_0 = arith.constant 0 : i32
    return %arg0, %arg3, %1, %c0_i32 : i32, i32, i32, i32
  }
  func.func @transform_2(%arg0: i32, %arg1: i32, %arg2: i32, %arg3: i32) -> (i32, i32, i32, i32) {
    %c1_i32 = arith.constant 1 : i32
    %0 = arith.muli %arg1, %c1_i32 : i32
    %1 = arith.addi %0, %arg2 : i32
    %c0_i32 = arith.constant 0 : i32
    %c0_i32_0 = arith.constant 0 : i32
    return %arg0, %arg3, %1, %c0_i32 : i32, i32, i32, i32
  }
  func.func @transform_3(%arg0: i32, %arg1: i32, %arg2: i32, %arg3: i32) -> (i32, i32, i32, i32) {
    %c1_i32 = arith.constant 1 : i32
    %0 = arith.muli %arg1, %c1_i32 : i32
    %1 = arith.addi %0, %arg2 : i32
    %c0_i32 = arith.constant 0 : i32
    %c0_i32_0 = arith.constant 0 : i32
    %c0_i32_1 = arith.constant 0 : i32
    return %arg0, %c0_i32, %1, %c0_i32_0 : i32, i32, i32, i32
  }
  func.func @transform_4(%arg0: i32, %arg1: i32, %arg2: i32, %arg3: i32) -> (i32, i32, i32, i32) {
    %c0_i32 = arith.constant 0 : i32
    %c0_i32_0 = arith.constant 0 : i32
    %c0_i32_1 = arith.constant 0 : i32
    return %arg0, %arg1, %c0_i32, %c0_i32_0 : i32, i32, i32, i32
  }
  func.func @transform_5(%arg0: i32, %arg1: i32, %arg2: i32, %arg3: i32) -> (i32, i32, i32, i32) {
    %c0_i32 = arith.constant 0 : i32
    %c0_i32_0 = arith.constant 0 : i32
    %c0_i32_1 = arith.constant 0 : i32
    return %arg0, %arg1, %c0_i32, %c0_i32_0 : i32, i32, i32, i32
  }
}

</mosaic_0001>

<llo_original>
// kernel: _forward_depth.1
$region0: #{_forward_depth.1}
  #allocation0 [shape = 'u32[]', space=smem, size = 0x4, offset = 0x4, fixed_abs, tag = 'smem constant byte address 0x4 - core index']
  #allocation1 [shape = 'u32[144,128]{1,0:T(1,128)}', space=vmem, size = 0x12000, scoped, tag = 'internal scratch']
  #allocation2 [shape = 'f32[2,128]{1,0:T(2,128)}', space=vmem, size = 0x400, scoped, tag = 'scratch operand']
  #allocation3 [shape = 'f32[2,128]{1,0:T(2,128)}', space=vmem, size = 0x400, scoped, tag = 'scratch operand']
  #allocation4 [shape = 'f32[1,1]{1,0:T(1,128)S(6)}', space=smem, size = 0x200, scoped, tag = 'scoped memory for _forward_depth.1']
  %s0 = inlined_call_operand.<no memory space> [shape: f32[1,1], index: 0, kind: input, shape index: {}]
  %s1 = inlined_call_operand.vmem [shape: f32[2,4,2,128], index: 1, kind: input, shape index: {}]
  %s2 = inlined_call_operand.vmem [shape: f32[2,4,2,128], index: 2, kind: input, shape index: {}]
  %s3 = inlined_call_operand.vmem [shape: f32[2,1,2,128], index: 3, kind: input, shape index: {}]
  %s4 = inlined_call_operand.vmem [shape: f32[2,1,8,128], index: 4, kind: output, shape index: {0}]
  %s5 = inlined_call_operand.vmem [shape: f32[2,1,8,128], index: 5, kind: output, shape index: {1}]
  %6 = xla_tuple %s4, %s5
  %s7 = sld [smem:[#allocation0]]
  $region65: #{_forward_depth.1} parent=0
    _
  %s9 = ssub.s32 1, %s7
  %s10 = scalar_select 0, %s9, %s7
  %11 = sst [smem:[#allocation4]] %s0
  loop: start=0, step=1, limit=10
  $region2: #{_forward_depth.1} parent=0 // loop_pre_header
    _
  $region3: #{_forward_depth.1} parent=0 // loop_header
    %s13 = sphi 0, %s17
    %p14 = scmp.ge.s32.totalorder %s13, 10
    %s20 = sphi 0, %s46
    %s21 = sphi 0, %s42
    %s22 = sphi 0, %s38
    %s23 = sphi 0, %s34
    %s24 = sphi 0, %s20
    %s25 = sphi 0, %s21
    %s26 = sphi 0, %s22
    %s27 = sphi 0, %s23
    %s28 = sphi 0, %s24
    %s29 = sphi 0, %s25
    %s30 = sphi 0, %s26
    %s31 = sphi 0, %s27
    %s47 = sphi 0, %s47
    %s49 = sphi 0, %s47
    %s50 = sphi 0, %s49
    %s64 = sphi 0, %s50
    %s76 = sphi 0, %s78
    %s79 = sphi 0, %s76
    %s80 = sphi 0, %s79
    %s96 = sphi 0, %s80
    %s108 = sphi 0, %s110
    %s111 = sphi 0, %s108
    %s112 = sphi 0, %s111
    %s128 = sphi 0, %s112
    %s138 = sphi 0, %s140
    %s141 = sphi 0, %s138
    %s142 = sphi 0, %s141
    %s158 = sphi 0, %s142
    %s166 = sphi 0, %s168
    %s169 = sphi 0, %s166
    %s170 = sphi 0, %s169
    %s186 = sphi 0, %s170
    %s194 = sphi 0, %s196
    %s197 = sphi 0, %s194
    %s198 = sphi 0, %s197
    %s214 = sphi 0, %s198
  $region4: #{_forward_depth.1} parent=0 // loop_header_branch
    %16 = sbr.rel (%p14) target = $region8
  $region5: #{_forward_depth.1} parent=0 // loop_body
    %s18 = ssub.s32 %s13, 1
    %s19 = ssub.s32 %s13, 2
    %s32 = sadd.s32 1, %s23
    %p33 = scmp.ge.s32.totalorder %s32, 4
    %s34 = scalar_select %p33, 0, %s32
    %s35 = sadd.s32 1, %s22
    %s36 = scalar_select %p33, %s35, %s22
    %p37 = scmp.ge.s32.totalorder %s36, 1
    %s38 = scalar_select %p37, 0, %s36
    %s39 = sadd.s32 1, %s21
    %s40 = scalar_select %p37, %s39, %s21
    %p41 = scmp.ge.s32.totalorder %s40, 1
    %s42 = scalar_select %p41, 0, %s40
    %s43 = sadd.s32 1, %s20
    %s44 = scalar_select %p41, %s43, %s20
    %p45 = scmp.ge.s32.totalorder %s44, 2
    %s46 = scalar_select %p45, 0, %s44
    %s48 = sadd.s32 %s47, 1
    %p51 = scmp.eq.s32.totalorder %s13, 7
    %p52 = scmp.ne.s32.totalorder %s47, %s49
    %p53 = scmp.eq.s32.totalorder %s13, 0
    %p54 = por %p52, %p53
    %p55 = scmp.ne.s32.totalorder %s47, %s49
    %p56 = scmp.eq.s32.totalorder %s18, 7
    %p57 = por %p55, %p56
    %p58 = scmp.ne.s32.totalorder %s49, %s50
    %p59 = scmp.eq.s32.totalorder %s18, 0
    %p60 = por %p58, %p59
    %p61 = scmp.ne.s32.totalorder %s49, %s50
    %p62 = scmp.eq.s32.totalorder %s19, 7
    %p63 = por %p61, %p62
    %p65 = scmp.ne.s32.totalorder %s50, %s64
    %p66 = scmp.eq.s32.totalorder %s19, 0
    %p67 = por %p65, %p66
    %s68 = sadd.s32 %s21, %s22
    %s69 = sadd.s32 %s42, %s38
    %s70 = ssub.s32 %s20, %s46
    %s71 = ssub.s32 %s23, %s34
    %s72 = sor.u32 %s70, %s71
    %s73 = ssub.s32 %s68, %s69
    %s74 = sor.u32 %s72, %s73
    %p75 = scmp.eq.s32.totalorder %s74, 0
    %s77 = sadd.s32 %s76, 1
    %s78 = scalar_select %p75, %s76, %s77
    %p81 = pneg %p75
    %p82 = scmp.eq.s32.totalorder %s13, 7
    %p83 = por %p81, %p82
    %p84 = scmp.ne.s32.totalorder %s76, %s79
    %p85 = scmp.eq.s32.totalorder %s13, 0
    %p86 = por %p84, %p85
    %p87 = scmp.ne.s32.totalorder %s76, %s79
    %p88 = scmp.eq.s32.totalorder %s18, 7
    %p89 = por %p87, %p88
    %p90 = scmp.ne.s32.totalorder %s79, %s80
    %p91 = scmp.eq.s32.totalorder %s18, 0
    %p92 = por %p90, %p91
    %p93 = scmp.ne.s32.totalorder %s79, %s80
    %p94 = scmp.eq.s32.totalorder %s19, 7
    %p95 = por %p93, %p94
    %p97 = scmp.ne.s32.totalorder %s80, %s96
    %p98 = scmp.eq.s32.totalorder %s19, 0
    %p99 = por %p97, %p98
    %s100 = sadd.s32 %s21, %s22
    %s101 = sadd.s32 %s42, %s38
    %s102 = ssub.s32 %s20, %s46
    %s103 = ssub.s32 %s23, %s34
    %s104 = sor.u32 %s102, %s103
    %s105 = ssub.s32 %s100, %s101
    %s106 = sor.u32 %s104, %s105
    %p107 = scmp.eq.s32.totalorder %s106, 0
    %s109 = sadd.s32 %s108, 1
    %s110 = scalar_select %p107, %s108, %s109
    %p113 = pneg %p107
    %p114 = scmp.eq.s32.totalorder %s13, 7
    %p115 = por %p113, %p114
    %p116 = scmp.ne.s32.totalorder %s108, %s111
    %p117 = scmp.eq.s32.totalorder %s13, 0
    %p118 = por %p116, %p117
    %p119 = scmp.ne.s32.totalorder %s108, %s111
    %p120 = scmp.eq.s32.totalorder %s18, 7
    %p121 = por %p119, %p120
    %p122 = scmp.ne.s32.totalorder %s111, %s112
    %p123 = scmp.eq.s32.totalorder %s18, 0
    %p124 = por %p122, %p123
    %p125 = scmp.ne.s32.totalorder %s111, %s112
    %p126 = scmp.eq.s32.totalorder %s19, 7
    %p127 = por %p125, %p126
    %p129 = scmp.ne.s32.totalorder %s112, %s128
    %p130 = scmp.eq.s32.totalorder %s19, 0
    %p131 = por %p129, %p130
    %s132 = sadd.s32 %s21, %s22
    %s133 = sadd.s32 %s42, %s38
    %s134 = ssub.s32 %s20, %s46
    %s135 = ssub.s32 %s132, %s133
    %s136 = sor.u32 %s134, %s135
    %p137 = scmp.eq.s32.totalorder %s136, 0
    %s139 = sadd.s32 %s138, 1
    %s140 = scalar_select %p137, %s138, %s139
    %p143 = pneg %p137
    %p144 = scmp.eq.s32.totalorder %s13, 7
    %p145 = por %p143, %p144
    %p146 = scmp.ne.s32.totalorder %s138, %s141
    %p147 = scmp.eq.s32.totalorder %s13, 0
    %p148 = por %p146, %p147
    %p149 = scmp.ne.s32.totalorder %s138, %s141
    %p150 = scmp.eq.s32.totalorder %s18, 7
    %p151 = por %p149, %p150
    %p152 = scmp.ne.s32.totalorder %s141, %s142
    %p153 = scmp.eq.s32.totalorder %s18, 0
    %p154 = por %p152, %p153
    %p155 = scmp.ne.s32.totalorder %s141, %s142
    %p156 = scmp.eq.s32.totalorder %s19, 7
    %p157 = por %p155, %p156
    %p159 = scmp.ne.s32.totalorder %s142, %s158
    %p160 = scmp.eq.s32.totalorder %s19, 0
    %p161 = por %p159, %p160
    %s162 = ssub.s32 %s20, %s46
    %s163 = ssub.s32 %s21, %s42
    %s164 = sor.u32 %s162, %s163
    %p165 = scmp.eq.s32.totalorder %s164, 0
    %s167 = sadd.s32 %s166, 1
    %s168 = scalar_select %p165, %s166, %s167
    %p171 = pneg %p165
    %p172 = scmp.eq.s32.totalorder %s13, 7
    %p173 = por %p171, %p172
    %p174 = scmp.ne.s32.totalorder %s166, %s169
    %p175 = scmp.eq.s32.totalorder %s13, 0
    %p176 = por %p174, %p175
    %p177 = scmp.ne.s32.totalorder %s166, %s169
    %p178 = scmp.eq.s32.totalorder %s18, 7
    %p179 = por %p177, %p178
    %p180 = scmp.ne.s32.totalorder %s169, %s170
    %p181 = scmp.eq.s32.totalorder %s18, 0
    %p182 = por %p180, %p181
    %p183 = scmp.ne.s32.totalorder %s169, %s170
    %p184 = scmp.eq.s32.totalorder %s19, 7
    %p185 = por %p183, %p184
    %p187 = scmp.ne.s32.totalorder %s170, %s186
    %p188 = scmp.eq.s32.totalorder %s19, 0
    %p189 = por %p187, %p188
    %s190 = ssub.s32 %s20, %s46
    %s191 = ssub.s32 %s21, %s42
    %s192 = sor.u32 %s190, %s191
    %p193 = scmp.eq.s32.totalorder %s192, 0
    %s195 = sadd.s32 %s194, 1
    %s196 = scalar_select %p193, %s194, %s195
    %p199 = pneg %p193
    %p200 = scmp.eq.s32.totalorder %s13, 7
    %p201 = por %p199, %p200
    %p202 = scmp.ne.s32.totalorder %s194, %s197
    %p203 = scmp.eq.s32.totalorder %s13, 0
    %p204 = por %p202, %p203
    %p205 = scmp.ne.s32.totalorder %s194, %s197
    %p206 = scmp.eq.s32.totalorder %s18, 7
    %p207 = por %p205, %p206
    %p208 = scmp.ne.s32.totalorder %s197, %s198
    %p209 = scmp.eq.s32.totalorder %s18, 0
    %p210 = por %p208, %p209
    %p211 = scmp.ne.s32.totalorder %s197, %s198
    %p212 = scmp.eq.s32.totalorder %s19, 7
    %p213 = por %p211, %p212
    %p215 = scmp.ne.s32.totalorder %s198, %s214
    %p216 = scmp.eq.s32.totalorder %s19, 0
    %p217 = por %p215, %p216
    %p218 = scmp.le.s32.totalorder 1, %s13
    %p219 = scmp.lt.s32.totalorder %s13, 9
    %p220 = pnand %p218, %p219
    %p221 = pneg %p220
    // Predicated region
    $region9: #{_forward_depth.1} parent=5 // pred_check
      _
    $region10: #{_forward_depth.1} parent=5 // pred_check_branch
      %223 = sbr.rel (%p220) target = $region12
    $region11: #{_forward_depth.1} parent=5 // pred_region
      %s224 = ssub.s32 %s13, 1
      // Predicated region
      $region13: #{_forward_depth.1} parent=11 // pred_check
        %p225 = pneg %p60
      $region14: #{_forward_depth.1} parent=11 // pred_check_branch
        %227 = sbr.rel (%p225) target = $region16
      $region15: #{_forward_depth.1} parent=11 // pred_region
        _
      $region16: #{_forward_depth.1} parent=11 // pred_fallthru
        _
    $region12: #{_forward_depth.1} parent=5 // pred_fallthru
      _
    %p228 = scmp.lt.s32.totalorder %s13, 8
    // Predicated region
    $region17: #{_forward_depth.1} parent=5 // pred_check
      %p229 = pneg %p228
    $region18: #{_forward_depth.1} parent=5 // pred_check_branch
      %231 = sbr.rel (%p229) target = $region20
    $region19: #{_forward_depth.1} parent=5 // pred_region
      // Predicated region
      $region21: #{_forward_depth.1} parent=19 // pred_check
        %p232 = pneg %p86
      $region22: #{_forward_depth.1} parent=19 // pred_check_branch
        %234 = sbr.rel (%p232) target = $region24
      $region23: #{_forward_depth.1} parent=19 // pred_region
        %s235 = sadd.s32 %s21, %s22
        %p236 = scmp.lt.s32.totalorder %s20, 1
        %s237 = scalar_select %p236, %s20, 1
        %p238 = scmp.lt.s32.totalorder %s23, 3
        %s239 = scalar_select %p238, %s23, 3
        %p240 = scmp.lt.s32.totalorder %s235, 0
        %s241 = scalar_select %p240, %s235, 0
        %s242 = sadd.s32 %s241, %s239
        %s243 = smul.addr %s237, 4
        %s244 = sadd.s32 %s242, %s243
        %s245 = smul.addr %s244, 2
        %s246 = scalar_lea.vmem %s1, %s245
        %s247 = sadd.s32 %s21, %s22
      $region24: #{_forward_depth.1} parent=19 // pred_fallthru
        _
      // Predicated region
      $region25: #{_forward_depth.1} parent=19 // pred_check
        %p248 = pneg %p118
      $region26: #{_forward_depth.1} parent=19 // pred_check_branch
        %250 = sbr.rel (%p248) target = $region28
      $region27: #{_forward_depth.1} parent=19 // pred_region
        %s251 = sadd.s32 %s21, %s22
        %p252 = scmp.lt.s32.totalorder %s20, 1
        %s253 = scalar_select %p252, %s20, 1
        %p254 = scmp.lt.s32.totalorder %s23, 3
        %s255 = scalar_select %p254, %s23, 3
        %p256 = scmp.lt.s32.totalorder %s251, 0
        %s257 = scalar_select %p256, %s251, 0
        %s258 = sadd.s32 %s257, %s255
        %s259 = smul.addr %s253, 4
        %s260 = sadd.s32 %s258, %s259
        %s261 = smul.addr %s260, 2
        %s262 = scalar_lea.vmem %s2, %s261
        %s263 = sadd.s32 %s21, %s22
      $region28: #{_forward_depth.1} parent=19 // pred_fallthru
        _
      // Predicated region
      $region29: #{_forward_depth.1} parent=19 // pred_check
        %p264 = pneg %p148
      $region30: #{_forward_depth.1} parent=19 // pred_check_branch
        %266 = sbr.rel (%p264) target = $region32
      $region31: #{_forward_depth.1} parent=19 // pred_region
        %s267 = sadd.s32 %s21, %s22
        %p268 = scmp.lt.s32.totalorder %s20, 1
        %s269 = scalar_select %p268, %s20, 1
        %p270 = scmp.lt.s32.totalorder %s267, 0
        %s271 = scalar_select %p270, %s267, 0
        %s272 = sadd.s32 %s271, %s269
        %s273 = smul.addr %s272, 2
        %s274 = scalar_lea.vmem %s3, %s273
        %s275 = sadd.s32 %s21, %s22
      $region32: #{_forward_depth.1} parent=19 // pred_fallthru
        _
    $region20: #{_forward_depth.1} parent=5 // pred_fallthru
      _
    %p276 = scmp.le.s32.totalorder 1, %s13
    %p277 = scmp.lt.s32.totalorder %s13, 9
    %p278 = pnand %p276, %p277
    %p279 = pneg %p278
    // Predicated region
    $region33: #{_forward_depth.1} parent=5 // pred_check
      _
    $region34: #{_forward_depth.1} parent=5 // pred_check_branch
      %281 = sbr.rel (%p278) target = $region36
    $region35: #{_forward_depth.1} parent=5 // pred_region
      %s282 = ssub.s32 %s13, 1
      %p283 = pneg %p60
      %p284 = pneg %p57
      %s285 = sadd.s32 %s25, %s26
      %p286 = scmp.lt.s32.totalorder %s24, 1
      %s287 = scalar_select %p286, %s24, 1
      %p288 = scmp.lt.s32.totalorder %s27, 3
      %s289 = scalar_select %p288, %s27, 3
      %p290 = scmp.lt.s32.totalorder %s285, 0
      %s291 = scalar_select %p290, %s285, 0
      %s292 = sadd.s32 %s291, %s289
      %s293 = smul.addr %s287, 4
      %s294 = sadd.s32 %s292, %s293
      %s295 = smul.addr %s294, 2
      %s296 = scalar_lea.vmem %s1, %s295
      %p297 = pneg %p92
      %p298 = pneg %p89
      %s299 = sadd.s32 %s25, %s26
      %p300 = scmp.lt.s32.totalorder %s24, 1
      %s301 = scalar_select %p300, %s24, 1
      %p302 = scmp.lt.s32.totalorder %s27, 3
      %s303 = scalar_select %p302, %s27, 3
      %p304 = scmp.lt.s32.totalorder %s299, 0
      %s305 = scalar_select %p304, %s299, 0
      %s306 = sadd.s32 %s305, %s303
      %s307 = smul.addr %s301, 4
      %s308 = sadd.s32 %s306, %s307
      %s309 = smul.addr %s308, 2
      %s310 = scalar_lea.vmem %s2, %s309
      %p311 = pneg %p124
      %p312 = pneg %p121
      %s313 = sadd.s32 %s25, %s26
      %p314 = scmp.lt.s32.totalorder %s24, 1
      %s315 = scalar_select %p314, %s24, 1
      %p316 = scmp.lt.s32.totalorder %s313, 0
      %s317 = scalar_select %p316, %s313, 0
      %s318 = sadd.s32 %s317, %s315
      %s319 = smul.addr %s318, 2
      %s320 = scalar_lea.vmem %s3, %s319
      %p321 = pneg %p154
      %p322 = pneg %p151
      %p323 = pneg %p182
      %p324 = pneg %p179
      %p325 = scmp.lt.s32.totalorder %s24, 1
      %s326 = scalar_select %p325, %s24, 1
      %p327 = scmp.lt.s32.totalorder %s25, 0
      %s328 = scalar_select %p327, %s25, 0
      %s329 = sadd.s32 %s328, %s326
      %s330 = smul.addr %s329, 8
      %s331 = scalar_lea.vmem %s4, %s330
      %p332 = pneg %p210
      %p333 = pneg %p207
      %p334 = scmp.lt.s32.totalorder %s24, 1
      %s335 = scalar_select %p334, %s24, 1
      %p336 = scmp.lt.s32.totalorder %s25, 0
      %s337 = scalar_select %p336, %s25, 0
      %s338 = sadd.s32 %s337, %s335
      %s339 = smul.addr %s338, 8
      %s340 = scalar_lea.vmem %s5, %s339
      %s341 = sadd.s32 %s25, %s26
      %p342 = scmp.lt.s32.totalorder %s24, 1
      %s343 = scalar_select %p342, %s24, 1
      %p344 = scmp.lt.s32.totalorder %s27, 3
      %s345 = scalar_select %p344, %s27, 3
      %p346 = scmp.lt.s32.totalorder %s341, 0
      %s347 = scalar_select %p346, %s341, 0
      %s348 = sadd.s32 %s347, %s345
      %s349 = smul.addr %s343, 4
      %s350 = sadd.s32 %s348, %s349
      %s351 = smul.addr %s350, 2
      %s352 = scalar_lea.vmem %s1, %s351
      %s353 = sadd.s32 %s25, %s26
      %s354 = sadd.s32 %s25, %s26
      %p355 = scmp.lt.s32.totalorder %s24, 1
      %s356 = scalar_select %p355, %s24, 1
      %p357 = scmp.lt.s32.totalorder %s27, 3
      %s358 = scalar_select %p357, %s27, 3
      %p359 = scmp.lt.s32.totalorder %s354, 0
      %s360 = scalar_select %p359, %s354, 0
      %s361 = sadd.s32 %s360, %s358
      %s362 = smul.addr %s356, 4
      %s363 = sadd.s32 %s361, %s362
      %s364 = smul.addr %s363, 2
      %s365 = scalar_lea.vmem %s2, %s364
      %s366 = sadd.s32 %s25, %s26
      %s367 = sadd.s32 %s25, %s26
      %p368 = scmp.lt.s32.totalorder %s24, 1
      %s369 = scalar_select %p368, %s24, 1
      %p370 = scmp.lt.s32.totalorder %s367, 0
      %s371 = scalar_select %p370, %s367, 0
      %s372 = sadd.s32 %s371, %s369
      %s373 = smul.addr %s372, 2
      %s374 = scalar_lea.vmem %s3, %s373
      %s375 = sadd.s32 %s25, %s26
      %p376 = scmp.lt.s32.totalorder %s24, 1
      %s377 = scalar_select %p376, %s24, 1
      %p378 = scmp.lt.s32.totalorder %s25, 0
      %s379 = scalar_select %p378, %s25, 0
      %s380 = sadd.s32 %s379, %s377
      %s381 = smul.addr %s380, 8
      %s382 = scalar_lea.vmem %s4, %s381
      %p383 = scmp.lt.s32.totalorder %s24, 1
      %s384 = scalar_select %p383, %s24, 1
      %p385 = scmp.lt.s32.totalorder %s25, 0
      %s386 = scalar_select %p385, %s25, 0
      %s387 = sadd.s32 %s386, %s384
      %s388 = smul.addr %s387, 8
      %s389 = scalar_lea.vmem %s5, %s388
      %p390 = scmp.eq.s32.totalorder %s26, 0
      %p391 = scmp.eq.s32.totalorder %s27, 0
      %p392 = pnand %p390, %p391
      %p393 = pneg %p392
      // Predicated region
      $region37: #{_forward_depth.1} parent=35 // pred_check
        _
      $region38: #{_forward_depth.1} parent=35 // pred_check_branch
        %395 = sbr.rel (%p392) target = $region40
      $region39: #{_forward_depth.1} parent=35 // pred_region
        %396 = vst [vmem:[#allocation2] sm:$0x3] 0.0
        %397 = vst [vmem:[#allocation3] sm:$0x3] 0.0
      $region40: #{_forward_depth.1} parent=35 // pred_fallthru
        _
      %v398 = vld [vmem:[%s352] sm:$0x3]
      %v399 = vld [vmem:[%s365] sm:$0x3]
      %v400 = vsub.f32 %v398, %v399
      %v401 = vand.u32 2147483647, %v400
      %v402 = vld [vmem:[%s374] sm:$0x3]
      %s403 = sld [smem:[#allocation4]]
      %v404 = vstv %s403
      %vm405 = vcmp.gt.f32.partialorder %v402, %v404
      %v406 = vsel %vm405, 1, 0
      %v407 = vcvt.s32.f32 %v406
      %v408 = vmul.f32 %v401, %v407
      %v409 = vld [vmem:[#allocation2] sm:$0x3]
      %v410 = vadd.f32 %v409, %v401
      %411 = vst [vmem:[#allocation2] sm:$0x3] %v410
      %v412 = vld [vmem:[#allocation3] sm:$0x3]
      %v413 = vadd.f32 %v412, %v408
      %414 = vst [vmem:[#allocation3] sm:$0x3] %v413
      %p415 = scmp.eq.s32.totalorder %s27, 3
      %p416 = pnand %p390, %p415
      %p417 = pneg %p416
      // Predicated region
      $region41: #{_forward_depth.1} parent=35 // pred_check
        _
      $region42: #{_forward_depth.1} parent=35 // pred_check_branch
        %419 = sbr.rel (%p416) target = $region44
      $region43: #{_forward_depth.1} parent=35 // pred_region
        %v420 = vld [vmem:[#allocation2] sm:$0x3]
        %vm421 = vcmask 1041408
        %v422 = vsel %vm421, %v420, 0.0
        %423 = vadd.xlane.f32.xlu0 %v422
        %v424 = vpop.xlane.xlu0 %423
        %v425 = vrot.slane %v424, 4
        %v426 = vadd.f32 %v424, %v425
        %v427 = vrot.slane %v426, 2
        %v428 = vadd.f32 %v426, %v427
        %v429 = vrot.slane %v428, 1
        %v430 = vadd.f32 %v428, %v429
        %s431 = vtos %v430
        %v432 = vstv %s431
        %433 = vst [vmem:[%s382] sm:$0xff] %v432
        %v434 = vld [vmem:[#allocation3] sm:$0x3]
        %v435 = vsel %vm421, %v434, 0.0
        %436 = vadd.xlane.f32.xlu0 %v435
        %v437 = vpop.xlane.xlu0 %436
        %v438 = vrot.slane %v437, 4
        %v439 = vadd.f32 %v437, %v438
        %v440 = vrot.slane %v439, 2
        %v441 = vadd.f32 %v439, %v440
        %v442 = vrot.slane %v441, 1
        %v443 = vadd.f32 %v441, %v442
        %s444 = vtos %v443
        %v445 = vstv %s444
        %446 = vst [vmem:[%s389] sm:$0xff] %v445
      $region44: #{_forward_depth.1} parent=35 // pred_fallthru
        _
      %p447 = scmp.lt.s32.totalorder %s24, 1
      %s448 = scalar_select %p447, %s24, 1
      %p449 = scmp.lt.s32.totalorder %s25, 0
      %s450 = scalar_select %p449, %s25, 0
      %s451 = sadd.s32 %s450, %s448
      %s452 = smul.addr %s451, 8
      %s453 = scalar_lea.vmem %s4, %s452
      %p454 = scmp.lt.s32.totalorder %s24, 1
      %s455 = scalar_select %p454, %s24, 1
      %p456 = scmp.lt.s32.totalorder %s25, 0
      %s457 = scalar_select %p456, %s25, 0
      %s458 = sadd.s32 %s457, %s455
      %s459 = smul.addr %s458, 8
      %s460 = scalar_lea.vmem %s5, %s459
      // Predicated region
      $region45: #{_forward_depth.1} parent=35 // pred_check
        %p461 = pneg %p179
      $region46: #{_forward_depth.1} parent=35 // pred_check_branch
        %463 = sbr.rel (%p461) target = $region48
      $region47: #{_forward_depth.1} parent=35 // pred_region
        _
      $region48: #{_forward_depth.1} parent=35 // pred_fallthru
        _
      // Predicated region
      $region49: #{_forward_depth.1} parent=35 // pred_check
        %p464 = pneg %p207
      $region50: #{_forward_depth.1} parent=35 // pred_check_branch
        %466 = sbr.rel (%p464) target = $region52
      $region51: #{_forward_depth.1} parent=35 // pred_region
        _
      $region52: #{_forward_depth.1} parent=35 // pred_fallthru
        _
    $region36: #{_forward_depth.1} parent=5 // pred_fallthru
      _
    %p467 = scmp.le.s32.totalorder 2, %s13
    // Predicated region
    $region53: #{_forward_depth.1} parent=5 // pred_check
      %p468 = pneg %p467
    $region54: #{_forward_depth.1} parent=5 // pred_check_branch
      %470 = sbr.rel (%p468) target = $region56
    $region55: #{_forward_depth.1} parent=5 // pred_region
      %s471 = ssub.s32 %s13, 2
      // Predicated region
      $region57: #{_forward_depth.1} parent=55 // pred_check
        %p472 = pneg %p185
      $region58: #{_forward_depth.1} parent=55 // pred_check_branch
        %474 = sbr.rel (%p472) target = $region60
      $region59: #{_forward_depth.1} parent=55 // pred_region
        %p475 = scmp.lt.s32.totalorder %s28, 1
        %s476 = scalar_select %p475, %s28, 1
        %p477 = scmp.lt.s32.totalorder %s29, 0
        %s478 = scalar_select %p477, %s29, 0
        %s479 = sadd.s32 %s478, %s476
        %s480 = smul.addr %s479, 8
        %s481 = scalar_lea.vmem %s4, %s480
      $region60: #{_forward_depth.1} parent=55 // pred_fallthru
        _
      // Predicated region
      $region61: #{_forward_depth.1} parent=55 // pred_check
        %p482 = pneg %p213
      $region62: #{_forward_depth.1} parent=55 // pred_check_branch
        %484 = sbr.rel (%p482) target = $region64
      $region63: #{_forward_depth.1} parent=55 // pred_region
        %p485 = scmp.lt.s32.totalorder %s28, 1
        %s486 = scalar_select %p485, %s28, 1
        %p487 = scmp.lt.s32.totalorder %s29, 0
        %s488 = scalar_select %p487, %s29, 0
        %s489 = sadd.s32 %s488, %s486
        %s490 = smul.addr %s489, 8
        %s491 = scalar_lea.vmem %s5, %s490
      $region64: #{_forward_depth.1} parent=55 // pred_fallthru
        _
    $region56: #{_forward_depth.1} parent=5 // pred_fallthru
      _
  $region6: #{_forward_depth.1} parent=0 // loop_footer
    %s17 = sadd.s32 1, %s13
  $region7: #{_forward_depth.1} parent=0 // loop_footer_branch
    %12 = sbr.rel target = $region3
  $region8: #{_forward_depth.1} parent=0 // loop_exit
    _

</llo_original>
